<compile_context>
chip_gen: v5e
topology: v5e:2x2
jax: 0.10.0
libtpu: 0.0.40
codegen_flags: <defaults>
</compile_context>

<pallas_src>
import jax
import jax.numpy as jnp
import numpy as np
from jax.experimental import pallas as pl
from jax.experimental.pallas import tpu as pltpu

_GRIDLESS_MAX_BATCH = 512  # above this: >=2-step "parallel" grid (both v7x TCs)


def _round_up(x, m):
    return ((x + m - 1) // m) * m


def _pi_mlp_kernel(obs_t_ref, w1_ref, b1_ref, w2_ref, b2_ref, w3_ref, b3_ref,
                   out_t_ref):
    """Feature-major 3-layer MLP for one batch tile.

    obs_t_ref : [obs_size, tb]   (batch on the 128-lane axis)
    w*_ref    : [out, in]        (PyTorch nn.Linear layout)
    b*_ref    : [out, 1] float32
    out_t_ref : [2*A, tb] float32 (lane-dense store)
    """
    xt = obs_t_ref[...]

    # Layer 1: matmul (f32 accumulate) -> bias add -> ReLU (all f32).
    h1 = jnp.dot(w1_ref[...], xt, preferred_element_type=jnp.float32) + b1_ref[...]
    h1 = jnp.maximum(h1, 0.0).astype(w2_ref.dtype)  # feed MXU in weight dtype

    # Layer 2.
    h2 = jnp.dot(w2_ref[...], h1, preferred_element_type=jnp.float32) + b2_ref[...]
    h2 = jnp.maximum(h2, 0.0).astype(w3_ref.dtype)

    # Output layer: single lane-dense [2A, tb] store (split happens in wrapper).
    out = jnp.dot(w3_ref[...], h2, preferred_element_type=jnp.float32) + b3_ref[...]
    out_t_ref[...] = out.astype(out_t_ref.dtype)


def pi_mlp_forward(obs, params, *, batch_block=8192, use_bf16=None,
                   obs_transposed=False):
    """Forward pass. Returns (mean, log_std), each [B, action_size] float32.

    obs: [B, obs_size] (module layout) or [obs_size, B] if obs_transposed=True.
         Feature-major callers avoid the one-time layout transpose entirely.
    params: (w1, b1, w2, b2, w3, b3); w_i: [out, in] (PyTorch nn.Linear layout),
            b_i: [out, 1].
    batch_block: max batch tile for the gridded path. Per-step DMA must exceed
        the ~0.35us grid-step cost: use >= ~3072 on v5e, 4096-8192 on v6e/v7x.
    use_bf16: None -> auto (bf16 on the batch-tiled path, f32 on the tiny
        gridless path). Accumulation, bias, ReLU and the output stay f32.
    """
    w1, b1, w2, b2, w3, b3 = params
    if obs_transposed:
        obs_size, B = obs.shape
        obs_t = obs
    else:
        B, obs_size = obs.shape
        # One-time layout change so the batch lands on the 128-lane axis inside
        # the kernel. Producers that can emit feature-major obs should pass
        # obs_transposed=True and skip this copy.
        obs_t = obs.T
    two_a = w3.shape[0]
    action_size = two_a // 2

    gridless = B <= _GRIDLESS_MAX_BATCH
    if use_bf16 is None:
        use_bf16 = not gridless
    compute_dtype = jnp.bfloat16 if use_bf16 else jnp.float32

    obs_c = obs_t.astype(compute_dtype)
    w1c, w2c, w3c = (w.astype(compute_dtype) for w in (w1, w2, w3))
    # Biases stay f32: they are added to the f32 accumulator inside the kernel.
    b1f, b2f, b3f = (b.astype(jnp.float32) for b in (b1, b2, b3))
    args = (obs_c, w1c, b1f, w2c, b2f, w3c, b3f)

    if gridless:
        # Tiny-batch path: whole problem is a few KB, any grid step would be
        # pure overhead. Single VMEM block, one TensorCore.
        vmem = pl.BlockSpec(memory_space=pltpu.MemorySpace.VMEM)
        out_t = pl.pallas_call(
            _pi_mlp_kernel,
            out_shape=jax.ShapeDtypeStruct((two_a, B), jnp.float32),
            in_specs=[vmem] * 7,
            out_specs=vmem,
        )(*args)
    else:
        # Batch-tiled path: only the lane (batch) axis is tiled. Cap the tile
        # so there are always >= 2 grid steps; the "parallel" axis can then be
        # sharded across both v7x TensorCores. Ragged tail (B % tb != 0) is
        # handled by Pallas partial-block masking — no jnp.pad copy of obs.
        tb = max(128, min(batch_block, _round_up(pl.cdiv(B, 2), 128)))
        grid = (pl.cdiv(B, tb),)

        def resident(arr):
            # Whole array, same block every step -> stays VMEM-resident.
            # (pl.Buffered(1) single-buffering is possible here, but all the
            #  weights and biases together are < 20 KB, so the saving is
            #  negligible.)
            return pl.BlockSpec(arr.shape, lambda i: (0, 0))

        out_t = pl.pallas_call(
            _pi_mlp_kernel,
            out_shape=jax.ShapeDtypeStruct((two_a, B), jnp.float32),
            grid=grid,
            in_specs=[
                pl.BlockSpec((obs_size, tb), lambda i: (0, i)),
                resident(w1c), resident(b1f),
                resident(w2c), resident(b2f),
                resident(w3c), resident(b3f),
            ],
            out_specs=pl.BlockSpec((two_a, tb), lambda i: (0, i)),
            compiler_params=pltpu.CompilerParams(
                dimension_semantics=("parallel",),
                vmem_limit_bytes=32 * 1024 * 1024,
            ),
        )(*args)

    # mean/log_std split + back to the module's batch-major layout. This is
    # cheap XLA layout work on a small [2A, B] array, outside the kernel.
    mean = out_t[:action_size, :].T
    log_std = out_t[action_size:, :].T
    return mean, log_std


def init_params(key, obs_size, hidden_sizes, action_size):
    """Deterministic synthetic init (PyTorch nn.Linear layout: W [out, in])."""
    sizes = [obs_size] + list(hidden_sizes) + [2 * action_size]
    params = []
    for fan_in, fan_out in zip(sizes[:-1], sizes[1:]):
        kw, kb, key = jax.random.split(key, 3)
        bound = 1.0 / np.sqrt(fan_in)
        w = jax.random.uniform(kw, (fan_out, fan_in), jnp.float32, -bound, bound)
        b = jax.random.uniform(kb, (fan_out, 1), jnp.float32, -bound, bound)
        params += [w, b]
    return tuple(params)


def reference_forward(obs, params):
    w1, b1, w2, b2, w3, b3 = params
    h1 = jnp.maximum(obs @ w1.T + b1[:, 0], 0.0)
    h2 = jnp.maximum(h1 @ w2.T + b2[:, 0], 0.0)
    out = h2 @ w3.T + b3[:, 0]
    a = w3.shape[0] // 2
    return out[:, :a], out[:, a:]


if __name__ == "__main__":
    # Small shapes consistent with the module: 1-D Box obs, 1-D Box action.
    batch = 2
    obs_size = 16
    hidden_sizes = (32, 32)
    action_size = 4
    # hidden_nonlinearity = "ReLU"

    key = jax.random.PRNGKey(0)
    k_obs, k_params, k_big = jax.random.split(key, 3)
    obs = jax.random.normal(k_obs, (batch, obs_size), dtype=jnp.float32)
    params = init_params(k_params, obs_size, hidden_sizes, action_size)
    ref_mean, ref_log_std = reference_forward(obs, params)

    # --- Path 1: tiny batch, gridless single-block kernel (f32). ---
    mean, log_std = pi_mlp_forward(obs, params)
    jax.block_until_ready((mean, log_std))
    assert mean.shape == (batch, action_size)
    assert log_std.shape == (batch, action_size)
    np.testing.assert_allclose(np.asarray(mean), np.asarray(ref_mean),
                               rtol=1e-5, atol=1e-5)
    np.testing.assert_allclose(np.asarray(log_std), np.asarray(ref_log_std),
                               rtol=1e-5, atol=1e-5)

    # --- Path 1b: caller already holds feature-major obs (no wrapper copy). ---
    mean_t, log_std_t = pi_mlp_forward(obs.T, params, obs_transposed=True)
    jax.block_until_ready((mean_t, log_std_t))
    np.testing.assert_allclose(np.asarray(mean_t), np.asarray(ref_mean),
                               rtol=1e-5, atol=1e-5)
    np.testing.assert_allclose(np.asarray(log_std_t), np.asarray(ref_log_std),
                               rtol=1e-5, atol=1e-5)

    # --- Path 2: batch-tiled grid (>=2 parallel steps, ragged tail), f32. ---
    big_b = 1000  # > gridless threshold, not a multiple of the tile
    big_obs = jax.random.normal(k_big, (big_b, obs_size), dtype=jnp.float32)
    ref_mean_b, ref_log_std_b = reference_forward(big_obs, params)
    mean_b, log_std_b = pi_mlp_forward(big_obs, params, use_bf16=False)
    jax.block_until_ready((mean_b, log_std_b))
    np.testing.assert_allclose(np.asarray(mean_b), np.asarray(ref_mean_b),
                               rtol=1e-5, atol=1e-5)
    np.testing.assert_allclose(np.asarray(log_std_b), np.asarray(ref_log_std_b),
                               rtol=1e-5, atol=1e-5)

    # --- Path 3: default bf16 inputs / f32 accumulate (looser tolerance). ---
    mean_h, log_std_h = pi_mlp_forward(big_obs, params)
    jax.block_until_ready((mean_h, log_std_h))
    np.testing.assert_allclose(np.asarray(mean_h), np.asarray(ref_mean_b),
                               rtol=5e-2, atol=5e-2)
    np.testing.assert_allclose(np.asarray(log_std_h), np.asarray(ref_log_std_b),
                               rtol=5e-2, atol=5e-2)

    print("KERNEL_OK")
</pallas_src>

<mosaic_0001>
module attributes {stable_mosaic.version = 11 : i64} {
  func.func @_pi_mlp_kernel(%arg0: memref<16x2xf32, #tpu.memory_space<vmem>>, %arg1: memref<32x16xf32, #tpu.memory_space<vmem>>, %arg2: memref<32x1xf32, #tpu.memory_space<vmem>>, %arg3: memref<32x32xf32, #tpu.memory_space<vmem>>, %arg4: memref<32x1xf32, #tpu.memory_space<vmem>>, %arg5: memref<8x32xf32, #tpu.memory_space<vmem>>, %arg6: memref<8x1xf32, #tpu.memory_space<vmem>>, %arg7: memref<8x2xf32, #tpu.memory_space<vmem>>) attributes {dimension_semantics = [], scalar_prefetch = 0 : i64, scratch_operands = 0 : i64, tpu.core_type = #tpu.core_type<tc>} {
    %c0 = arith.constant 0 : index
    %c0_0 = arith.constant 0 : index
    %0 = vector.load %arg0[%c0, %c0_0] : memref<16x2xf32, #tpu.memory_space<vmem>>, vector<16x2xf32>
    %c0_1 = arith.constant 0 : index
    %c0_2 = arith.constant 0 : index
    %1 = vector.load %arg1[%c0_1, %c0_2] : memref<32x16xf32, #tpu.memory_space<vmem>>, vector<32x16xf32>
    %cst = arith.constant dense<0.000000e+00> : vector<32x2xf32>
    %2 = tpu.matmul %1, %0, %cst {dimension_numbers = #tpu.dot_dimension_numbers<[1], [0], [0], [1], [0, 0, 1, 1], [], []>} : vector<32x16xf32>, vector<16x2xf32>, vector<32x2xf32> -> vector<32x2xf32>
    %c0_3 = arith.constant 0 : index
    %c0_4 = arith.constant 0 : index
    %3 = vector.load %arg2[%c0_3, %c0_4] : memref<32x1xf32, #tpu.memory_space<vmem>>, vector<32x1xf32>
    %4 = vector.broadcast %3 : vector<32x1xf32> to vector<32x2xf32>
    %5 = arith.addf %2, %4 : vector<32x2xf32>
    %cst_5 = arith.constant 0.000000e+00 : f32
    %6 = vector.broadcast %cst_5 : f32 to vector<32x2xf32>
    %7 = arith.maximumf %5, %6 : vector<32x2xf32>
    %c0_6 = arith.constant 0 : index
    %c0_7 = arith.constant 0 : index
    %8 = vector.load %arg3[%c0_6, %c0_7] : memref<32x32xf32, #tpu.memory_space<vmem>>, vector<32x32xf32>
    %cst_8 = arith.constant dense<0.000000e+00> : vector<32x2xf32>
    %9 = tpu.matmul %8, %7, %cst_8 {dimension_numbers = #tpu.dot_dimension_numbers<[1], [0], [0], [1], [0, 0, 1, 1], [], []>} : vector<32x32xf32>, vector<32x2xf32>, vector<32x2xf32> -> vector<32x2xf32>
    %c0_9 = arith.constant 0 : index
    %c0_10 = arith.constant 0 : index
    %10 = vector.load %arg4[%c0_9, %c0_10] : memref<32x1xf32, #tpu.memory_space<vmem>>, vector<32x1xf32>
    %11 = vector.broadcast %10 : vector<32x1xf32> to vector<32x2xf32>
    %12 = arith.addf %9, %11 : vector<32x2xf32>
    %cst_11 = arith.constant 0.000000e+00 : f32
    %13 = vector.broadcast %cst_11 : f32 to vector<32x2xf32>
    %14 = arith.maximumf %12, %13 : vector<32x2xf32>
    %c0_12 = arith.constant 0 : index
    %c0_13 = arith.constant 0 : index
    %15 = vector.load %arg5[%c0_12, %c0_13] : memref<8x32xf32, #tpu.memory_space<vmem>>, vector<8x32xf32>
    %cst_14 = arith.constant dense<0.000000e+00> : vector<8x2xf32>
    %16 = tpu.matmul %15, %14, %cst_14 {dimension_numbers = #tpu.dot_dimension_numbers<[1], [0], [0], [1], [0, 0, 1, 1], [], []>} : vector<8x32xf32>, vector<32x2xf32>, vector<8x2xf32> -> vector<8x2xf32>
    %c0_15 = arith.constant 0 : index
    %c0_16 = arith.constant 0 : index
    %17 = vector.load %arg6[%c0_15, %c0_16] : memref<8x1xf32, #tpu.memory_space<vmem>>, vector<8x1xf32>
    %18 = vector.broadcast %17 : vector<8x1xf32> to vector<8x2xf32>
    %19 = arith.addf %16, %18 : vector<8x2xf32>
    %c0_17 = arith.constant 0 : index
    %c0_18 = arith.constant 0 : index
    %20 = vector.load %arg7[%c0_17, %c0_18] : memref<8x2xf32, #tpu.memory_space<vmem>>, vector<8x2xf32>
    tpu.vector_store %arg7[%c0_17, %c0_18], %19 {strides = array<i32>} : memref<8x2xf32, #tpu.memory_space<vmem>>, vector<8x2xf32>,
    return
  }
}

</mosaic_0001>

<llo_original>
// kernel: tpu_custom_call.1
$region0: #{tpu_custom_call.1}
  #allocation0 [shape = 'u32[]', space=smem, size = 0x4, offset = 0x4, fixed_abs, tag = 'smem constant byte address 0x4 - core index']
  #allocation1 [shape = 'u32[72,128]{1,0:T(1,128)}', space=vmem, size = 0x9000, scoped, tag = 'internal scratch']
  %s0 = inlined_call_operand.vmem [shape: f32[16,2], index: 0, kind: input, shape index: {}]
  %s1 = inlined_call_operand.vmem [shape: f32[32,16], index: 1, kind: input, shape index: {}]
  %s2 = inlined_call_operand.vmem [shape: f32[32,1], index: 2, kind: input, shape index: {}]
  %s3 = inlined_call_operand.vmem [shape: f32[32,32], index: 3, kind: input, shape index: {}]
  %s4 = inlined_call_operand.vmem [shape: f32[32,1], index: 4, kind: input, shape index: {}]
  %s5 = inlined_call_operand.vmem [shape: f32[8,32], index: 5, kind: input, shape index: {}]
  %s6 = inlined_call_operand.vmem [shape: f32[8,1], index: 6, kind: input, shape index: {}]
  %s7 = inlined_call_operand.vmem [shape: f32[8,2], index: 7, kind: output, shape index: {}]
  %s8 = sld [smem:[#allocation0]]
  $region38: #{tpu_custom_call.1} parent=0
    _
  %s10 = ssub.s32 1, %s8
  %s11 = scalar_select 0, %s10, %s8
  // Predicated region
  $region2: #{tpu_custom_call.1} parent=0 // pred_check
    _
  $region3: #{tpu_custom_call.1} parent=0 // pred_check_branch
    %13 = sbr.rel (0) target = $region5
  $region4: #{tpu_custom_call.1} parent=0 // pred_region
    _
  $region5: #{tpu_custom_call.1} parent=0 // pred_fallthru
    _
  // Predicated region
  $region6: #{tpu_custom_call.1} parent=0 // pred_check
    _
  $region7: #{tpu_custom_call.1} parent=0 // pred_check_branch
    %15 = sbr.rel (0) target = $region9
  $region8: #{tpu_custom_call.1} parent=0 // pred_region
    _
  $region9: #{tpu_custom_call.1} parent=0 // pred_fallthru
    _
  // Predicated region
  $region10: #{tpu_custom_call.1} parent=0 // pred_check
    _
  $region11: #{tpu_custom_call.1} parent=0 // pred_check_branch
    %17 = sbr.rel (0) target = $region13
  $region12: #{tpu_custom_call.1} parent=0 // pred_region
    _
  $region13: #{tpu_custom_call.1} parent=0 // pred_fallthru
    _
  // Predicated region
  $region14: #{tpu_custom_call.1} parent=0 // pred_check
    _
  $region15: #{tpu_custom_call.1} parent=0 // pred_check_branch
    %19 = sbr.rel (0) target = $region17
  $region16: #{tpu_custom_call.1} parent=0 // pred_region
    _
  $region17: #{tpu_custom_call.1} parent=0 // pred_fallthru
    _
  // Predicated region
  $region18: #{tpu_custom_call.1} parent=0 // pred_check
    _
  $region19: #{tpu_custom_call.1} parent=0 // pred_check_branch
    %21 = sbr.rel (0) target = $region21
  $region20: #{tpu_custom_call.1} parent=0 // pred_region
    _
  $region21: #{tpu_custom_call.1} parent=0 // pred_fallthru
    _
  // Predicated region
  $region22: #{tpu_custom_call.1} parent=0 // pred_check
    _
  $region23: #{tpu_custom_call.1} parent=0 // pred_check_branch
    %23 = sbr.rel (0) target = $region25
  $region24: #{tpu_custom_call.1} parent=0 // pred_region
    _
  $region25: #{tpu_custom_call.1} parent=0 // pred_fallthru
    _
  // Predicated region
  $region26: #{tpu_custom_call.1} parent=0 // pred_check
    _
  $region27: #{tpu_custom_call.1} parent=0 // pred_check_branch
    %25 = sbr.rel (0) target = $region29
  $region28: #{tpu_custom_call.1} parent=0 // pred_region
    _
  $region29: #{tpu_custom_call.1} parent=0 // pred_fallthru
    _
  %v26 = vld [vmem:[%s0] sm:$0xff]
  %v27 = vld [vmem:[%s0 + $0x8] sm:$0xff]
  %v28 = vld [vmem:[%s1] sm:$0xff]
  %v29 = vld [vmem:[%s1 + $0x8] sm:$0xff]
  %v30 = vld [vmem:[%s1 + $0x10] sm:$0xff]
  %v31 = vld [vmem:[%s1 + $0x18] sm:$0xff]
  %v32 = vld [vmem:[%s2] sm:$0xff]
  %v33 = vld [vmem:[%s2 + $0x8] sm:$0xff]
  %v34 = vld [vmem:[%s2 + $0x10] sm:$0xff]
  %v35 = vld [vmem:[%s2 + $0x18] sm:$0xff]
  %37 = vset.pattern.permute.xlu0 0
  %38 = vperm.xlu0 %37, %v32
  %v39 = vpop.permute.xlu0 %38
  %42 = vset.pattern.permute.xlu0 0
  %43 = vperm.xlu0 %42, %v33
  %v44 = vpop.permute.xlu0 %43
  %47 = vset.pattern.permute.xlu0 0
  %48 = vperm.xlu0 %47, %v34
  %v49 = vpop.permute.xlu0 %48
  %52 = vset.pattern.permute.xlu0 0
  %53 = vperm.xlu0 %52, %v35
  %v54 = vpop.permute.xlu0 %53
  %vm56 = vcmask 130048
  %v58 = vsel %vm56, %v28, 0
  %v61 = vsel %vm56, %v29, 0
  %v64 = vsel %vm56, %v30, 0
  %v67 = vsel %vm56, %v31, 0
  %69 = vmatpush.msra.mxu0 0.0
  %70 = vmatpush.msra.mxu0 0.0
  %71 = vmatpush.msra.mxu0 0.0
  %72 = vmatpush.msra.mxu0 0.0
  %73 = vmatpush.msra.mxu0 0.0
  %74 = vmatpush.msra.mxu0 0.0
  %75 = vmatpush.msra.mxu0 0.0
  %76 = vmatpush.msra.mxu0 0.0
  %77 = vmatpush.msra.mxu0 0.0
  %78 = vmatpush.msra.mxu0 0.0
  %79 = vmatpush.msra.mxu0 0.0
  %80 = vmatpush.msra.mxu0 0.0
  %81 = vmatpush.msra.mxu0 0.0
  %82 = vmatpush.msra.mxu0 0.0
  %83 = vmatpush.msra.mxu0 %v27
  %84 = vmatpush.msra.mxu0 %v26
  %85 = vmatmul.f32.gmra.mxu0 %v58
  %v86 = vpop.f32.mrf.mxu0
  %v87 = vadd.f32 %v39, %v86
  %88 = vmatmul.f32.gmra.mxu0 %v61
  %v89 = vpop.f32.mrf.mxu0
  %v90 = vadd.f32 %v44, %v89
  %91 = vmatmul.f32.gmra.mxu0 %v64
  %v92 = vpop.f32.mrf.mxu0
  %v93 = vadd.f32 %v49, %v92
  %94 = vmatmul.f32.gmra.mxu0 %v67
  %v95 = vpop.f32.mrf.mxu0
  %v96 = vadd.f32 %v54, %v95
  %97 = vdwg.mxu0
  %v98 = vmax.f32 %v87, 0.0
  %v99 = vmax.f32 %v90, 0.0
  %v100 = vmax.f32 %v93, 0.0
  %v101 = vmax.f32 %v96, 0.0
  %v102 = vld [vmem:[%s3] sm:$0xff]
  %v103 = vld [vmem:[%s3 + $0x8] sm:$0xff]
  %v104 = vld [vmem:[%s3 + $0x10] sm:$0xff]
  %v105 = vld [vmem:[%s3 + $0x18] sm:$0xff]
  %v106 = vld [vmem:[%s4] sm:$0xff]
  %v107 = vld [vmem:[%s4 + $0x8] sm:$0xff]
  %v108 = vld [vmem:[%s4 + $0x10] sm:$0xff]
  %v109 = vld [vmem:[%s4 + $0x18] sm:$0xff]
  %111 = vset.pattern.permute.xlu0 0
  %112 = vperm.xlu0 %111, %v106
  %v113 = vpop.permute.xlu0 %112
  %116 = vset.pattern.permute.xlu0 0
  %117 = vperm.xlu0 %116, %v107
  %v118 = vpop.permute.xlu0 %117
  %121 = vset.pattern.permute.xlu0 0
  %122 = vperm.xlu0 %121, %v108
  %v123 = vpop.permute.xlu0 %122
  %126 = vset.pattern.permute.xlu0 0
  %127 = vperm.xlu0 %126, %v109
  %v128 = vpop.permute.xlu0 %127
  %vm130 = vcmask 261120
  %v132 = vsel %vm130, %v102, 0
  %v135 = vsel %vm130, %v103, 0
  %v138 = vsel %vm130, %v104, 0
  %v141 = vsel %vm130, %v105, 0
  %143 = vmatpush.msra.mxu0 0.0
  %144 = vmatpush.msra.mxu0 0.0
  %145 = vmatpush.msra.mxu0 0.0
  %146 = vmatpush.msra.mxu0 0.0
  %147 = vmatpush.msra.mxu0 0.0
  %148 = vmatpush.msra.mxu0 0.0
  %149 = vmatpush.msra.mxu0 0.0
  %150 = vmatpush.msra.mxu0 0.0
  %151 = vmatpush.msra.mxu0 0.0
  %152 = vmatpush.msra.mxu0 0.0
  %153 = vmatpush.msra.mxu0 0.0
  %154 = vmatpush.msra.mxu0 0.0
  %155 = vmatpush.msra.mxu0 %v101
  %156 = vmatpush.msra.mxu0 %v100
  %157 = vmatpush.msra.mxu0 %v99
  %158 = vmatpush.msra.mxu0 %v98
  %159 = vmatmul.f32.gmra.mxu0 %v132
  %v160 = vpop.f32.mrf.mxu0
  %v161 = vadd.f32 %v113, %v160
  %162 = vmatmul.f32.gmra.mxu0 %v135
  %v163 = vpop.f32.mrf.mxu0
  %v164 = vadd.f32 %v118, %v163
  %165 = vmatmul.f32.gmra.mxu0 %v138
  %v166 = vpop.f32.mrf.mxu0
  %v167 = vadd.f32 %v123, %v166
  %168 = vmatmul.f32.gmra.mxu0 %v141
  %v169 = vpop.f32.mrf.mxu0
  %v170 = vadd.f32 %v128, %v169
  %171 = vdwg.mxu0
  %v172 = vmax.f32 %v161, 0.0
  %v173 = vmax.f32 %v164, 0.0
  %v174 = vmax.f32 %v167, 0.0
  %v175 = vmax.f32 %v170, 0.0
  %v176 = vld [vmem:[%s5] sm:$0xff]
  %v177 = vld [vmem:[%s6] sm:$0xff]
  %179 = vset.pattern.permute.xlu0 0
  %180 = vperm.xlu0 %179, %v177
  %v181 = vpop.permute.xlu0 %180
  %v184 = vsel %vm130, %v176, 0
  %186 = vmatpush.msra.mxu0 0.0
  %187 = vmatpush.msra.mxu0 0.0
  %188 = vmatpush.msra.mxu0 0.0
  %189 = vmatpush.msra.mxu0 0.0
  %190 = vmatpush.msra.mxu0 0.0
  %191 = vmatpush.msra.mxu0 0.0
  %192 = vmatpush.msra.mxu0 0.0
  %193 = vmatpush.msra.mxu0 0.0
  %194 = vmatpush.msra.mxu0 0.0
  %195 = vmatpush.msra.mxu0 0.0
  %196 = vmatpush.msra.mxu0 0.0
  %197 = vmatpush.msra.mxu0 0.0
  %198 = vmatpush.msra.mxu0 %v175
  %199 = vmatpush.msra.mxu0 %v174
  %200 = vmatpush.msra.mxu0 %v173
  %201 = vmatpush.msra.mxu0 %v172
  %202 = vmatmul.f32.gmra.mxu0 %v184
  %v203 = vpop.f32.mrf.mxu0
  %v204 = vadd.f32 %v181, %v203
  %205 = vdwg.mxu0
  %vm206 = vcmask 15360
  %207 = vst.msk [vmem:[%s7] sm:$0xff] %vm206, %v204
  // Predicated region
  $region30: #{tpu_custom_call.1} parent=0 // pred_check
    _
  $region31: #{tpu_custom_call.1} parent=0 // pred_check_branch
    %209 = sbr.rel (0) target = $region33
  $region32: #{tpu_custom_call.1} parent=0 // pred_region
    _
  $region33: #{tpu_custom_call.1} parent=0 // pred_fallthru
    _
  // Predicated region
  $region34: #{tpu_custom_call.1} parent=0 // pred_check
    _
  $region35: #{tpu_custom_call.1} parent=0 // pred_check_branch
    %211 = sbr.rel (0) target = $region37
  $region36: #{tpu_custom_call.1} parent=0 // pred_region
    _
  $region37: #{tpu_custom_call.1} parent=0 // pred_fallthru
    _

</llo_original>
